<compile_context>
chip_gen: v7x
topology: tpu7x:2x2x1
jax: 0.10.0
libtpu: 0.0.40
codegen_flags: <defaults>
</compile_context>

<pallas_src>
import jax
import jax.numpy as jnp
from jax.experimental import pallas as pl
from jax.experimental.pallas import tpu as pltpu

LANE = 128


# --------------------------------------------------------------------------- helpers
def _round_up(n: int, m: int) -> int:
    return ((n + m - 1) // m) * m


def _cdiv(a: int, b: int) -> int:
    return (a + b - 1) // b


def _device_kind() -> str:
    try:
        return jax.devices()[0].device_kind.lower()
    except Exception:
        return ""


def _vmem_budget_bytes() -> int:
    """~85% of this chip's per-core VMEM (generation aware, conservative fallback)."""
    try:
        cap = int(pltpu.get_tpu_info().vmem_capacity_bytes)
    except Exception:
        cap = 64 << 20
    return max(16 << 20, int(0.85 * cap))


def _prefers_256_mxu() -> bool:
    kind = _device_kind()
    return any(tag in kind for tag in ("v6", "v7", "trillium"))


def _num_tensorcores() -> int:
    return 2 if "v7" in _device_kind() else 1


def _pad_dim(n: int, prefer256: bool) -> int:
    """Lane-align a feature dim; prefer 256 multiples on 256x256-MXU chips when cheap."""
    p = _round_up(max(int(n), 1), LANE)
    if prefer256 and p % 256 != 0 and p >= 1024:
        # extra 128 inert zero columns is <=12.5% growth here -> better MXU occupancy
        p = _round_up(p, 256)
    return p


# --------------------------------------------------------------------------- kernels
def _mlp_kernel_resident(x_ref, w1_ref, b1_ref, w2_ref, b2_ref, o_ref):
    """Whole weights resident in VMEM; one grid axis over batch."""
    h = jnp.dot(x_ref[...], w1_ref[...], preferred_element_type=jnp.float32)
    h = jnp.maximum(h + b1_ref[...], 0.0)
    y = jnp.dot(h.astype(w2_ref.dtype), w2_ref[...],
                preferred_element_type=jnp.float32)
    o_ref[...] = jnp.maximum(y + b2_ref[...], 0.0).astype(o_ref.dtype)


def _mlp_kernel_htiled(x_ref, w1_ref, b1_ref, w2_ref, b2_ref, o_ref, acc_ref):
    """Hidden dim tiled: grid=(batch, h_tiles); f32 accumulator for layer-2 partials."""
    k = pl.program_id(1)

    @pl.when(k == 0)
    def _():
        acc_ref[...] = jnp.zeros_like(acc_ref)

    h = jnp.dot(x_ref[...], w1_ref[...], preferred_element_type=jnp.float32)
    h = jnp.maximum(h + b1_ref[...], 0.0)
    acc_ref[...] += jnp.dot(h.astype(w2_ref.dtype), w2_ref[...],
                            preferred_element_type=jnp.float32)

    @pl.when(k == pl.num_programs(1) - 1)
    def _():
        o_ref[...] = jnp.maximum(acc_ref[...] + b2_ref[...], 0.0).astype(o_ref.dtype)


# --------------------------------------------------------------------------- packing
def pack_mlp_params(w1, b1, w2, b2, *, compute_dtype=jnp.bfloat16, prefer256=None):
    """Pad (lane/MXU aligned) and cast the MLP weights ONCE; reuse across forward calls."""
    if prefer256 is None:
        prefer256 = _prefers_256_mxu()
    In, H = w1.shape
    H2, O = w2.shape
    assert H2 == H, "w1/w2 hidden dims must match"
    In_p, H_p, O_p = _pad_dim(In, prefer256), _pad_dim(H, prefer256), _pad_dim(O, prefer256)

    def pad2(a, rows, cols, dtype):
        a = jnp.asarray(a)
        if a.shape != (rows, cols):
            a = jnp.pad(a, ((0, rows - a.shape[0]), (0, cols - a.shape[1])))
        return a.astype(dtype)

    return dict(
        w1=pad2(w1, In_p, H_p, compute_dtype),
        b1=pad2(jnp.reshape(b1, (1, -1)), 1, H_p, jnp.float32),
        w2=pad2(w2, H_p, O_p, compute_dtype),
        b2=pad2(jnp.reshape(b2, (1, -1)), 1, O_p, jnp.float32),
        dims=(In, H, O),
        pdims=(In_p, H_p, O_p),
        compute_dtype=compute_dtype,
    )


# --------------------------------------------------------------------------- forward
def mlp_forward_packed(x, params, *, out_dtype=None, batch_tile=None, h_tile=None):
    """relu(relu(x @ w1 + b1) @ w2 + b2) using pre-packed params.  x: (B, In) -> (B, O)."""
    In, H, O = params["dims"]
    In_p, H_p, O_p = params["pdims"]
    compute_dtype = params["compute_dtype"]
    if out_dtype is None:
        out_dtype = compute_dtype   # bf16 output halves writeback + out-tile VMEM

    B = x.shape[0]
    assert x.shape[1] == In

    cbytes = jnp.dtype(compute_dtype).itemsize
    obytes = jnp.dtype(out_dtype).itemsize
    sublane = max(8, 32 // cbytes)           # 16 for bf16, 8 for f32

    vmem_budget = _vmem_budget_bytes()
    has_buffered = hasattr(pl, "Buffered")   # static check; no dead try/except fallback
    n_tc = _num_tensorcores()

    # ---- resident-weights vs H-tiled decision ------------------------------
    weight_bytes = (In_p * H_p + H_p * O_p) * cbytes
    resident_copies = 1 if has_buffered else 2
    use_h_tiling = h_tile is not None
    if h_tile is None and resident_copies * weight_bytes > min(32 << 20, vmem_budget // 2):
        use_h_tiling = True
        # each (W1 slice + W2 slice) block ~<= 8 MiB, lane aligned
        h_tile = max(256, _round_up((8 << 20) // max((In_p + O_p) * cbytes, 1), 256))
    if use_h_tiling:
        h_tile = min(_round_up(int(h_tile), LANE), H_p)
        n_h = _cdiv(H_p, h_tile)
        H_pp = n_h * h_tile                 # extra inert zero padding if needed
    else:
        h_tile = H_p
        n_h = 1
        H_pp = H_p

    w1_p, b1_p, w2_p, b2_p = params["w1"], params["b1"], params["w2"], params["b2"]
    if H_pp != H_p:                          # rare (forced odd h_tile): cheap inert re-pad
        w1_p = jnp.pad(w1_p, ((0, 0), (0, H_pp - H_p)))
        b1_p = jnp.pad(b1_p, ((0, 0), (0, H_pp - H_p)))
        w2_p = jnp.pad(w2_p, ((0, H_pp - H_p), (0, 0)))

    # ---- batch tile: amortize step overhead, feed every TC, avoid tail waste
    if batch_tile is None:
        row_bytes = In_p * cbytes + O_p * obytes
        target = max(sublane, (1 << 20) // max(row_bytes, 1))   # ~1 MiB x+out per step
        target = min(target, 2048)
        min_steps = 2 * n_tc
        if B > min_steps * sublane:
            target = min(target, _round_up(_cdiv(B, min_steps), sublane))
        batch_tile = target
    batch_tile = max(sublane, _round_up(min(int(batch_tile), _round_up(B, sublane)), sublane))
    n_b = _cdiv(B, batch_tile)
    batch_tile = _round_up(_cdiv(B, n_b), sublane)   # spread rows evenly over steps

    # ---- VMEM footprint / shrink if needed ---------------------------------
    def vmem_need(bt):
        if use_h_tiling:
            wts = 2 * ((In_p * h_tile + h_tile * O_p) * cbytes + h_tile * 4)  # pipelined
            wts += (1 if has_buffered else 2) * O_p * 4                       # b2 resident
            scratch = bt * O_p * 4
            interm = bt * (h_tile + O_p) * 4
        else:
            wts = resident_copies * ((In_p * H_pp + H_pp * O_p) * cbytes + (H_pp + O_p) * 4)
            scratch = 0
            interm = bt * (H_pp + O_p) * 4
        io = 2 * bt * In_p * cbytes + 2 * bt * O_p * obytes
        return wts + io + scratch + interm

    while batch_tile > sublane and vmem_need(batch_tile) > vmem_budget:
        batch_tile = max(sublane, _round_up(batch_tile // 2, sublane))
    n_b = _cdiv(B, batch_tile)
    B_p = n_b * batch_tile

    # ---- pad / cast activations (skip pad when already aligned) ------------
    if (B_p, In_p) != (B, In):
        x_p = jnp.pad(x, ((0, B_p - B), (0, In_p - In)))
    else:
        x_p = x
    x_p = x_p.astype(compute_dtype)

    vmem_limit = int(min(vmem_budget, max(vmem_need(batch_tile) * 3 // 2 + (4 << 20),
                                          16 << 20)))
    flops = 2 * B_p * (In_p * H_pp + H_pp * O_p)
    bytes_accessed = (B_p * In_p * cbytes
                      + (In_p * H_pp + H_pp * O_p) * cbytes
                      + (H_pp + O_p) * 4
                      + B_p * O_p * obytes)

    def const_spec(shape, n_grid_axes):
        imap = (lambda i: (0,) * len(shape)) if n_grid_axes == 1 \
            else (lambda i, k: (0,) * len(shape))
        if has_buffered:
            return pl.BlockSpec(shape, imap, pipeline_mode=pl.Buffered(1))
        return pl.BlockSpec(shape, imap)

    if use_h_tiling:
        kernel = _mlp_kernel_htiled
        grid = (n_b, n_h)
        in_specs = [
            pl.BlockSpec((batch_tile, In_p), lambda i, k: (i, 0)),
            pl.BlockSpec((In_p, h_tile), lambda i, k: (0, k)),
            pl.BlockSpec((1, h_tile), lambda i, k: (0, k)),
            pl.BlockSpec((h_tile, O_p), lambda i, k: (k, 0)),
            const_spec((1, O_p), 2),
        ]
        out_specs = pl.BlockSpec((batch_tile, O_p), lambda i, k: (i, 0))
        scratch_shapes = [pltpu.VMEM((batch_tile, O_p), jnp.float32)]
        dim_sem = ("parallel", "arbitrary")
    else:
        kernel = _mlp_kernel_resident
        grid = (n_b,)
        in_specs = [
            pl.BlockSpec((batch_tile, In_p), lambda i: (i, 0)),
            const_spec((In_p, H_pp), 1),
            const_spec((1, H_pp), 1),
            const_spec((H_pp, O_p), 1),
            const_spec((1, O_p), 1),
        ]
        out_specs = pl.BlockSpec((batch_tile, O_p), lambda i: (i, 0))
        scratch_shapes = []
        dim_sem = ("parallel",)

    out_p = pl.pallas_call(
        kernel,
        out_shape=jax.ShapeDtypeStruct((B_p, O_p), out_dtype),
        grid=grid,
        in_specs=in_specs,
        out_specs=out_specs,
        scratch_shapes=scratch_shapes,
        compiler_params=pltpu.CompilerParams(
            dimension_semantics=dim_sem,
            vmem_limit_bytes=vmem_limit,
        ),
        cost_estimate=pl.CostEstimate(
            flops=flops, transcendentals=0, bytes_accessed=bytes_accessed),
    )(x_p, w1_p, b1_p, w2_p, b2_p)

    return out_p[:B, :O]


def mlp_forward(x, w1, b1, w2, b2, *, compute_dtype=jnp.bfloat16, **kwargs):
    """One-shot convenience wrapper (packs per call; prefer pack_mlp_params + _packed)."""
    params = pack_mlp_params(w1, b1, w2, b2, compute_dtype=compute_dtype)
    return mlp_forward_packed(x, params, **kwargs)


# --------------------------------------------------------------------------- utilities
def init_mlp_params(key, input_size, hidden_size, output_size, dtype=jnp.float32):
    """Init mirroring torch.nn.Linear default (uniform(-1/sqrt(fan_in), 1/sqrt(fan_in)))."""
    k1, k2, k3, k4 = jax.random.split(key, 4)
    bound1 = 1.0 / (input_size ** 0.5)
    bound2 = 1.0 / (hidden_size ** 0.5)
    w1 = jax.random.uniform(k1, (input_size, hidden_size), dtype, -bound1, bound1)
    b1 = jax.random.uniform(k2, (1, hidden_size), dtype, -bound1, bound1)
    w2 = jax.random.uniform(k3, (hidden_size, output_size), dtype, -bound2, bound2)
    b2 = jax.random.uniform(k4, (1, output_size), dtype, -bound2, bound2)
    return w1, b1, w2, b2


def _reference(x, w1, b1, w2, b2, compute_dtype):
    """Pure-JAX reference mimicking the kernel's bf16-operand / f32-accumulate path."""
    f32 = jnp.float32
    xc = x.astype(compute_dtype).astype(f32)
    w1c = w1.astype(compute_dtype).astype(f32)
    w2c = w2.astype(compute_dtype).astype(f32)
    h = jnp.maximum(jnp.dot(xc, w1c, precision="highest")
                    + jnp.reshape(b1, (1, -1)).astype(f32), 0.0)
    hc = h.astype(compute_dtype).astype(f32)
    y = jnp.maximum(jnp.dot(hc, w2c, precision="highest")
                    + jnp.reshape(b2, (1, -1)).astype(f32), 0.0)
    return y


if __name__ == "__main__":
    key = jax.random.PRNGKey(0)
    kx1, kp1, kx2, kp2 = jax.random.split(key, 4)

    # ---- test 1: small MLP, resident-weight path ---------------------------
    batch, input_size, hidden_size, output_size = 8, 16, 32, 16
    x = jax.random.normal(kx1, (batch, input_size), jnp.float32)
    w1, b1, w2, b2 = init_mlp_params(kp1, input_size, hidden_size, output_size)

    params = pack_mlp_params(w1, b1, w2, b2)         # pad + cast once, reused
    out = jax.block_until_ready(mlp_forward_packed(x, params))
    ref = _reference(x, w1, b1, w2, b2, jnp.bfloat16)
    assert out.shape == (batch, output_size)
    assert jnp.allclose(out.astype(jnp.float32), ref, atol=2e-2, rtol=2e-2)

    # ---- test 2: forced H-tiled accumulator path (3 hidden tiles) ----------
    batch2, in2, hid2, out_sz2 = 64, 48, 300, 40
    x2 = jax.random.normal(kx2, (batch2, in2), jnp.float32)
    w1b, b1b, w2b, b2b = init_mlp_params(kp2, in2, hid2, out_sz2)
    params2 = pack_mlp_params(w1b, b1b, w2b, b2b)
    out2 = jax.block_until_ready(mlp_forward_packed(x2, params2, h_tile=128))
    ref2 = _reference(x2, w1b, b1b, w2b, b2b, jnp.bfloat16)
    assert out2.shape == (batch2, out_sz2)
    assert jnp.allclose(out2.astype(jnp.float32), ref2, atol=2e-2, rtol=2e-2)

    print("KERNEL_OK")
</pallas_src>

<mosaic_0001>
module attributes {stable_mosaic.version = 11 : i64} {
  func.func @_mlp_kernel_resident(%arg0: i32, %arg1: memref<16x128xbf16, #tpu.memory_space<vmem>>, %arg2: memref<128x128xbf16, #tpu.memory_space<vmem>>, %arg3: memref<1x128xf32, #tpu.memory_space<vmem>>, %arg4: memref<128x128xbf16, #tpu.memory_space<vmem>>, %arg5: memref<1x128xf32, #tpu.memory_space<vmem>>, %arg6: memref<16x128xbf16, #tpu.memory_space<vmem>>) attributes {dimension_semantics = [#tpu.dimension_semantics<parallel>], iteration_bounds = array<i64: 1>, scalar_prefetch = 0 : i64, scratch_operands = 0 : i64, tpu.core_type = #tpu.core_type<tc>, window_params = [{transform_indices = @transform_0, window_bounds = array<i64: 16, 128>}, {pipeline_mode = #tpu.pipeline_mode<synchronous>, transform_indices = @transform_1, window_bounds = array<i64: 128, 128>}, {pipeline_mode = #tpu.pipeline_mode<synchronous>, transform_indices = @transform_2, window_bounds = array<i64: 1, 128>}, {pipeline_mode = #tpu.pipeline_mode<synchronous>, transform_indices = @transform_3, window_bounds = array<i64: 128, 128>}, {pipeline_mode = #tpu.pipeline_mode<synchronous>, transform_indices = @transform_4, window_bounds = array<i64: 1, 128>}, {transform_indices = @transform_5, window_bounds = array<i64: 16, 128>}]} {
    %c0 = arith.constant 0 : index
    %c0_0 = arith.constant 0 : index
    %0 = vector.load %arg1[%c0, %c0_0] : memref<16x128xbf16, #tpu.memory_space<vmem>>, vector<16x128xbf16>
    %c0_1 = arith.constant 0 : index
    %c0_2 = arith.constant 0 : index
    %1 = vector.load %arg2[%c0_1, %c0_2] : memref<128x128xbf16, #tpu.memory_space<vmem>>, vector<128x128xbf16>
    %cst = arith.constant dense<0.000000e+00> : vector<16x128xf32>
    %2 = tpu.matmul %0, %1, %cst {dimension_numbers = #tpu.dot_dimension_numbers<[1], [0], [0], [1], [0, 0, 1, 1], [], []>} : vector<16x128xbf16>, vector<128x128xbf16>, vector<16x128xf32> -> vector<16x128xf32>
    %c0_3 = arith.constant 0 : index
    %c0_4 = arith.constant 0 : index
    %3 = vector.load %arg3[%c0_3, %c0_4] : memref<1x128xf32, #tpu.memory_space<vmem>>, vector<1x128xf32>
    %4 = vector.broadcast %3 : vector<1x128xf32> to vector<16x128xf32>
    %5 = arith.addf %2, %4 : vector<16x128xf32>
    %cst_5 = arith.constant 0.000000e+00 : f32
    %6 = vector.broadcast %cst_5 : f32 to vector<16x128xf32>
    %7 = arith.maximumf %5, %6 : vector<16x128xf32>
    %8 = arith.truncf %7 : vector<16x128xf32> to vector<16x128xbf16>
    %c0_6 = arith.constant 0 : index
    %c0_7 = arith.constant 0 : index
    %9 = vector.load %arg4[%c0_6, %c0_7] : memref<128x128xbf16, #tpu.memory_space<vmem>>, vector<128x128xbf16>
    %cst_8 = arith.constant dense<0.000000e+00> : vector<16x128xf32>
    %10 = tpu.matmul %8, %9, %cst_8 {dimension_numbers = #tpu.dot_dimension_numbers<[1], [0], [0], [1], [0, 0, 1, 1], [], []>} : vector<16x128xbf16>, vector<128x128xbf16>, vector<16x128xf32> -> vector<16x128xf32>
    %c0_9 = arith.constant 0 : index
    %c0_10 = arith.constant 0 : index
    %11 = vector.load %arg5[%c0_9, %c0_10] : memref<1x128xf32, #tpu.memory_space<vmem>>, vector<1x128xf32>
    %12 = vector.broadcast %11 : vector<1x128xf32> to vector<16x128xf32>
    %13 = arith.addf %10, %12 : vector<16x128xf32>
    %cst_11 = arith.constant 0.000000e+00 : f32
    %14 = vector.broadcast %cst_11 : f32 to vector<16x128xf32>
    %15 = arith.maximumf %13, %14 : vector<16x128xf32>
    %16 = arith.truncf %15 : vector<16x128xf32> to vector<16x128xbf16>
    %c0_12 = arith.constant 0 : index
    %c0_13 = arith.constant 0 : index
    %17 = vector.load %arg6[%c0_12, %c0_13] : memref<16x128xbf16, #tpu.memory_space<vmem>>, vector<16x128xbf16>
    tpu.vector_store %arg6[%c0_12, %c0_13], %16 {strides = array<i32>} : memref<16x128xbf16, #tpu.memory_space<vmem>>, vector<16x128xbf16>,
    return
  }
  func.func @transform_0(%arg0: i32) -> (i32, i32) {
    %c0_i32 = arith.constant 0 : i32
    %c0_i32_0 = arith.constant 0 : i32
    return %arg0, %c0_i32 : i32, i32
  }
  func.func @transform_1(%arg0: i32) -> (i32, i32) {
    %c0_i32 = arith.constant 0 : i32
    %c0_i32_0 = arith.constant 0 : i32
    %c0_i32_1 = arith.constant 0 : i32
    return %c0_i32, %c0_i32_0 : i32, i32
  }
  func.func @transform_2(%arg0: i32) -> (i32, i32) {
    %c0_i32 = arith.constant 0 : i32
    %c0_i32_0 = arith.constant 0 : i32
    %c0_i32_1 = arith.constant 0 : i32
    return %c0_i32, %c0_i32_0 : i32, i32
  }
  func.func @transform_3(%arg0: i32) -> (i32, i32) {
    %c0_i32 = arith.constant 0 : i32
    %c0_i32_0 = arith.constant 0 : i32
    %c0_i32_1 = arith.constant 0 : i32
    return %c0_i32, %c0_i32_0 : i32, i32
  }
  func.func @transform_4(%arg0: i32) -> (i32, i32) {
    %c0_i32 = arith.constant 0 : i32
    %c0_i32_0 = arith.constant 0 : i32
    %c0_i32_1 = arith.constant 0 : i32
    return %c0_i32, %c0_i32_0 : i32, i32
  }
  func.func @transform_5(%arg0: i32) -> (i32, i32) {
    %c0_i32 = arith.constant 0 : i32
    %c0_i32_0 = arith.constant 0 : i32
    return %arg0, %c0_i32 : i32, i32
  }
}

</mosaic_0001>

<llo_original>
// kernel: tpu_custom_call.1
$region0: #{tpu_custom_call.1}
  #allocation0 [shape = 'u32[]', space=smem, size = 0x4, offset = 0x4, fixed_abs, tag = 'smem constant byte address 0x4 - core index']
  #allocation1 [shape = 'u32[144,128]{1,0:T(1,128)}', space=vmem, size = 0x12000, scoped, tag = 'internal scratch']
  %s0 = inlined_call_operand.hbm [shape: bf16[16,128], index: 0, kind: input, shape index: {}]
  %s1 = inlined_call_operand.hbm [shape: bf16[128,128], index: 1, kind: input, shape index: {}]
  %s2 = inlined_call_operand.vmem [shape: f32[1,128], index: 2, kind: input, shape index: {}]
  %s3 = inlined_call_operand.hbm [shape: bf16[128,128], index: 3, kind: input, shape index: {}]
  %s4 = inlined_call_operand.vmem [shape: f32[1,128], index: 4, kind: input, shape index: {}]
  %s5 = inlined_call_operand.hbm [shape: bf16[16,128], index: 5, kind: output, shape index: {}]
  %s6 = sld [smem:[#allocation0]]
  $region42: #{tpu_custom_call.1} parent=0
    _
  %s8 = ssub.s32 1, %s6
  %s9 = scalar_select 0, %s8, %s6
  $region1: #{tpu_custom_call.1} parent=0
    #allocation2 [shape = 'u8[4096]{0}', space=vmem, size = 0x1000, scoped, tag = 'input window, operand 0, single buffered']
    #allocation3 [shape = 's32[1]{0}', space=sflag, size = 0x4, scoped, tag = 'scoped memory for tpu_custom_call.1']
    #allocation4 [shape = 's32[1]{0}', space=sflag, size = 0x4, scoped, tag = 'scoped memory for tpu_custom_call.1']
    #allocation5 [shape = 'u8[32768]{0}', space=vmem, size = 0x8000, scoped, tag = 'input window, operand 1, single buffered']
    #allocation6 [shape = 's32[1]{0}', space=sflag, size = 0x4, scoped, tag = 'scoped memory for tpu_custom_call.1']
    #allocation7 [shape = 'u8[32768]{0}', space=vmem, size = 0x8000, scoped, tag = 'input window, operand 3, single buffered']
    #allocation8 [shape = 'u8[4096]{0}', space=vmem, size = 0x1000, scoped, tag = 'output window, operand 0, single buffered']
    %10 = vsyncpa [#allocation3], 0
    %11 = vsyncpa [#allocation6], 0
    %12 = vsyncpa [#allocation4], 0
    // Predicated region
    $region2: #{tpu_custom_call.1} parent=1 // pred_check
      _
    $region3: #{tpu_custom_call.1} parent=1 // pred_check_branch
      %14 = sbr.rel (0) target = $region5
    $region4: #{tpu_custom_call.1} parent=1 // pred_region
      %s16 = ssub.s32 128, 128
      %17 = vsyncadd [#allocation3], %s16
      %s18 = sshll.u32 [#allocation2], 4
      %s19 = int_to_ptr.vmem [resolvable:$true] %s18
      %24 = dma.hbm_to_vmem [thread:$0]  %s0, 128, %s19, [#allocation3], 64, 64, 4
    $region5: #{tpu_custom_call.1} parent=1 // pred_fallthru
      _
    // Predicated region
    $region6: #{tpu_custom_call.1} parent=1 // pred_check
      _
    $region7: #{tpu_custom_call.1} parent=1 // pred_check_branch
      %26 = sbr.rel (0) target = $region9
    $region8: #{tpu_custom_call.1} parent=1 // pred_region
      %s28 = ssub.s32 1024, 1024
      %29 = vsyncadd [#allocation6], %s28
      %s30 = sshll.u32 [#allocation5], 4
      %s31 = int_to_ptr.vmem [resolvable:$true] %s30
      %36 = dma.hbm_to_vmem [thread:$0]  %s1, 1024, %s31, [#allocation6], 64, 64, 4
    $region9: #{tpu_custom_call.1} parent=1 // pred_fallthru
      _
    // Predicated region
    $region10: #{tpu_custom_call.1} parent=1 // pred_check
      _
    $region11: #{tpu_custom_call.1} parent=1 // pred_check_branch
      %38 = sbr.rel (0) target = $region13
    $region12: #{tpu_custom_call.1} parent=1 // pred_region
      _
    $region13: #{tpu_custom_call.1} parent=1 // pred_fallthru
      _
    // Predicated region
    $region14: #{tpu_custom_call.1} parent=1 // pred_check
      _
    $region15: #{tpu_custom_call.1} parent=1 // pred_check_branch
      %40 = sbr.rel (0) target = $region17
    $region16: #{tpu_custom_call.1} parent=1 // pred_region
      %s42 = ssub.s32 1024, 1024
      %43 = vsyncadd [#allocation6], %s42
      %s44 = sshll.u32 [#allocation7], 4
      %s45 = int_to_ptr.vmem [resolvable:$true] %s44
      %50 = dma.hbm_to_vmem [thread:$0]  %s3, 1024, %s45, [#allocation6], 64, 64, 4
    $region17: #{tpu_custom_call.1} parent=1 // pred_fallthru
      _
    // Predicated region
    $region18: #{tpu_custom_call.1} parent=1 // pred_check
      _
    $region19: #{tpu_custom_call.1} parent=1 // pred_check_branch
      %52 = sbr.rel (0) target = $region21
    $region20: #{tpu_custom_call.1} parent=1 // pred_region
      _
    $region21: #{tpu_custom_call.1} parent=1 // pred_fallthru
      _
    // Predicated region
    $region22: #{tpu_custom_call.1} parent=1 // pred_check
      _
    $region23: #{tpu_custom_call.1} parent=1 // pred_check_branch
      %54 = sbr.rel (0) target = $region25
    $region24: #{tpu_custom_call.1} parent=1 // pred_region
      %55 = dma.done [#allocation3], 128
    $region25: #{tpu_custom_call.1} parent=1 // pred_fallthru
      _
    // Predicated region
    $region26: #{tpu_custom_call.1} parent=1 // pred_check
      _
    $region27: #{tpu_custom_call.1} parent=1 // pred_check_branch
      %57 = sbr.rel (0) target = $region29
    $region28: #{tpu_custom_call.1} parent=1 // pred_region
      %58 = dma.done [#allocation6], 1024
    $region29: #{tpu_custom_call.1} parent=1 // pred_fallthru
      _
    // Predicated region
    $region30: #{tpu_custom_call.1} parent=1 // pred_check
      _
    $region31: #{tpu_custom_call.1} parent=1 // pred_check_branch
      %60 = sbr.rel (0) target = $region33
    $region32: #{tpu_custom_call.1} parent=1 // pred_region
      %61 = dma.done [#allocation6], 1024
    $region33: #{tpu_custom_call.1} parent=1 // pred_fallthru
      _
    %v63 = vld [vmem:[#allocation2] sm:$0xf]
    %v64 = vld [vmem:[#allocation2 + $0x4] sm:$0xf]
    %v65 = vld [vmem:[#allocation5] sm:$0xf]
    %v66 = vld [vmem:[#allocation5 + $0x4] sm:$0xf]
    %v67 = vld [vmem:[#allocation5 + $0x8] sm:$0xf]
    %v68 = vld [vmem:[#allocation5 + $0xc] sm:$0xf]
    %v69 = vld [vmem:[#allocation5 + $0x10] sm:$0xf]
    %v70 = vld [vmem:[#allocation5 + $0x14] sm:$0xf]
    %v71 = vld [vmem:[#allocation5 + $0x18] sm:$0xf]
    %v72 = vld [vmem:[#allocation5 + $0x1c] sm:$0xf]
    %v73 = vld [vmem:[#allocation5 + $0x20] sm:$0xf]
    %v74 = vld [vmem:[#allocation5 + $0x24] sm:$0xf]
    %v75 = vld [vmem:[#allocation5 + $0x28] sm:$0xf]
    %v76 = vld [vmem:[#allocation5 + $0x2c] sm:$0xf]
    %v77 = vld [vmem:[#allocation5 + $0x30] sm:$0xf]
    %v78 = vld [vmem:[#allocation5 + $0x34] sm:$0xf]
    %v79 = vld [vmem:[#allocation5 + $0x38] sm:$0xf]
    %v80 = vld [vmem:[#allocation5 + $0x3c] sm:$0xf]
    %v81 = vld [vmem:[%s2] sm:$0x1]
    %v83 = vlaneseq
    %v84 = vshrl.u32 %v83, 7
    %v85 = vsub.s32 0, %v84
    %v86 = vrot.slane %v81, %v85
    %v90 = vunpack.c.l.b16 %v63
    %v91 = vunpack.c.l.b16 %v64
    %v92 = vpack.c.b16 %v91, %v90
    %v110 = vunpack.c.l.b16 %v65
    %v111 = vunpack.c.l.b16 %v66
    %v112 = vunpack.c.l.b16 %v67
    %v113 = vunpack.c.l.b16 %v68
    %v114 = vunpack.c.l.b16 %v69
    %v115 = vunpack.c.l.b16 %v70
    %v116 = vunpack.c.l.b16 %v71
    %v117 = vunpack.c.l.b16 %v72
    %v118 = vunpack.c.l.b16 %v73
    %v119 = vunpack.c.l.b16 %v74
    %v120 = vunpack.c.l.b16 %v75
    %v121 = vunpack.c.l.b16 %v76
    %v122 = vunpack.c.l.b16 %v77
    %v123 = vunpack.c.l.b16 %v78
    %v124 = vunpack.c.l.b16 %v79
    %v125 = vunpack.c.l.b16 %v80
    %v126 = vpack.c.b16 %v111, %v110
    %v127 = vpack.c.b16 %v113, %v112
    %v128 = vpack.c.b16 %v115, %v114
    %v129 = vpack.c.b16 %v117, %v116
    %v130 = vpack.c.b16 %v119, %v118
    %v131 = vpack.c.b16 %v121, %v120
    %v132 = vpack.c.b16 %v123, %v122
    %v133 = vpack.c.b16 %v125, %v124
    %142 = vmatprep.subr.bf16.mxu0 0
    %143 = vmatpush1.bf16.msra.mxu0 %v126
    %144 = vmatprep.subr.bf16.mxu0 0
    %145 = vmatpush1.bf16.msra.mxu0 %v127
    %146 = vmatprep.subr.bf16.mxu0 0
    %147 = vmatpush1.bf16.msra.mxu0 %v128
    %148 = vmatprep.subr.bf16.mxu0 0
    %149 = vmatpush1.bf16.msra.mxu0 %v129
    %150 = vmatprep.subr.bf16.mxu0 0
    %151 = vmatpush1.bf16.msra.mxu0 %v130
    %152 = vmatprep.subr.bf16.mxu0 0
    %153 = vmatpush1.bf16.msra.mxu0 %v131
    %154 = vmatprep.subr.bf16.mxu0 0
    %155 = vmatpush1.bf16.msra.mxu0 %v132
    %156 = vmatprep.subr.bf16.mxu0 0
    %157 = vmatpush1.bf16.msra.mxu0 %v133
    %158 = vmatprep.subr.bf16.mxu0 0
    %159 = vmatpush1.bf16.msra.mxu0 0
    %160 = vmatprep.subr.bf16.mxu0 0
    %161 = vmatpush1.bf16.msra.mxu0 0
    %162 = vmatprep.subr.bf16.mxu0 0
    %163 = vmatpush1.bf16.msra.mxu0 0
    %164 = vmatprep.subr.bf16.mxu0 0
    %165 = vmatpush1.bf16.msra.mxu0 0
    %166 = vmatprep.subr.bf16.mxu0 0
    %167 = vmatpush1.bf16.msra.mxu0 0
    %168 = vmatprep.subr.bf16.mxu0 0
    %169 = vmatpush1.bf16.msra.mxu0 0
    %170 = vmatprep.subr.bf16.mxu0 0
    %171 = vmatpush1.bf16.msra.mxu0 0
    %172 = vmatprep.subr.bf16.mxu0 0
    %173 = vmatpush1.bf16.msra.mxu0 0
    %174 = vmatprep.mubr.bf16.mxu0 0
    %175 = vmatmul.mubr.bf16.gmra.mrb[0].mxu0 %v92
    %v176 = vpop.f32.mrb[0].mxu0
    %v177 = vadd.f32 %v86, %v176
    %v178 = vpop.f32.mrb[0].mxu0
    %v179 = vpop.f32.mrb[0].mxu0
    %v180 = vadd.f32 %v86, %v179
    %v181 = vpop.f32.mrb[0].mxu0
    %182 = vdwg.mxu0
    %v183 = vmax.f32 %v177, 0.0
    %v184 = vmax.f32 %v180, 0.0
    %v185 = vpack.c.bf16 %v184, %v183
    %v186 = vld [vmem:[#allocation7] sm:$0xf]
    %v187 = vld [vmem:[#allocation7 + $0x4] sm:$0xf]
    %v188 = vld [vmem:[#allocation7 + $0x8] sm:$0xf]
    %v189 = vld [vmem:[#allocation7 + $0xc] sm:$0xf]
    %v190 = vld [vmem:[#allocation7 + $0x10] sm:$0xf]
    %v191 = vld [vmem:[#allocation7 + $0x14] sm:$0xf]
    %v192 = vld [vmem:[#allocation7 + $0x18] sm:$0xf]
    %v193 = vld [vmem:[#allocation7 + $0x1c] sm:$0xf]
    %v194 = vld [vmem:[#allocation7 + $0x20] sm:$0xf]
    %v195 = vld [vmem:[#allocation7 + $0x24] sm:$0xf]
    %v196 = vld [vmem:[#allocation7 + $0x28] sm:$0xf]
    %v197 = vld [vmem:[#allocation7 + $0x2c] sm:$0xf]
    %v198 = vld [vmem:[#allocation7 + $0x30] sm:$0xf]
    %v199 = vld [vmem:[#allocation7 + $0x34] sm:$0xf]
    %v200 = vld [vmem:[#allocation7 + $0x38] sm:$0xf]
    %v201 = vld [vmem:[#allocation7 + $0x3c] sm:$0xf]
    %v202 = vld [vmem:[%s4] sm:$0x1]
    %v204 = vlaneseq
    %v205 = vshrl.u32 %v204, 7
    %v206 = vsub.s32 0, %v205
    %v207 = vrot.slane %v202, %v206
    %v225 = vunpack.c.l.b16 %v186
    %v226 = vunpack.c.l.b16 %v187
    %v227 = vunpack.c.l.b16 %v188
    %v228 = vunpack.c.l.b16 %v189
    %v229 = vunpack.c.l.b16 %v190
    %v230 = vunpack.c.l.b16 %v191
    %v231 = vunpack.c.l.b16 %v192
    %v232 = vunpack.c.l.b16 %v193
    %v233 = vunpack.c.l.b16 %v194
    %v234 = vunpack.c.l.b16 %v195
    %v235 = vunpack.c.l.b16 %v196
    %v236 = vunpack.c.l.b16 %v197
    %v237 = vunpack.c.l.b16 %v198
    %v238 = vunpack.c.l.b16 %v199
    %v239 = vunpack.c.l.b16 %v200
    %v240 = vunpack.c.l.b16 %v201
    %v241 = vpack.c.b16 %v226, %v225
    %v242 = vpack.c.b16 %v228, %v227
    %v243 = vpack.c.b16 %v230, %v229
    %v244 = vpack.c.b16 %v232, %v231
    %v245 = vpack.c.b16 %v234, %v233
    %v246 = vpack.c.b16 %v236, %v235
    %v247 = vpack.c.b16 %v238, %v237
    %v248 = vpack.c.b16 %v240, %v239
    %257 = vmatprep.subr.bf16.mxu0 0
    %258 = vmatpush1.bf16.msra.mxu0 %v241
    %259 = vmatprep.subr.bf16.mxu0 0
    %260 = vmatpush1.bf16.msra.mxu0 %v242
    %261 = vmatprep.subr.bf16.mxu0 0
    %262 = vmatpush1.bf16.msra.mxu0 %v243
    %263 = vmatprep.subr.bf16.mxu0 0
    %264 = vmatpush1.bf16.msra.mxu0 %v244
    %265 = vmatprep.subr.bf16.mxu0 0
    %266 = vmatpush1.bf16.msra.mxu0 %v245
    %267 = vmatprep.subr.bf16.mxu0 0
    %268 = vmatpush1.bf16.msra.mxu0 %v246
    %269 = vmatprep.subr.bf16.mxu0 0
    %270 = vmatpush1.bf16.msra.mxu0 %v247
    %271 = vmatprep.subr.bf16.mxu0 0
    %272 = vmatpush1.bf16.msra.mxu0 %v248
    %273 = vmatprep.subr.bf16.mxu0 0
    %274 = vmatpush1.bf16.msra.mxu0 0
    %275 = vmatprep.subr.bf16.mxu0 0
    %276 = vmatpush1.bf16.msra.mxu0 0
    %277 = vmatprep.subr.bf16.mxu0 0
    %278 = vmatpush1.bf16.msra.mxu0 0
    %279 = vmatprep.subr.bf16.mxu0 0
    %280 = vmatpush1.bf16.msra.mxu0 0
    %281 = vmatprep.subr.bf16.mxu0 0
    %282 = vmatpush1.bf16.msra.mxu0 0
    %283 = vmatprep.subr.bf16.mxu0 0
    %284 = vmatpush1.bf16.msra.mxu0 0
    %285 = vmatprep.subr.bf16.mxu0 0
    %286 = vmatpush1.bf16.msra.mxu0 0
    %287 = vmatprep.subr.bf16.mxu0 0
    %288 = vmatpush1.bf16.msra.mxu0 0
    %289 = vmatprep.mubr.bf16.mxu0 0
    %290 = vmatmul.mubr.bf16.gmra.mrb[0].mxu0 %v185
    %v291 = vpop.f32.mrb[0].mxu0
    %v292 = vadd.f32 %v207, %v291
    %v293 = vpop.f32.mrb[0].mxu0
    %v294 = vpop.f32.mrb[0].mxu0
    %v295 = vadd.f32 %v207, %v294
    %v296 = vpop.f32.mrb[0].mxu0
    %297 = vdwg.mxu0
    %v298 = vmax.f32 %v292, 0.0
    %v299 = vmax.f32 %v295, 0.0
    %v300 = vpack.c.bf16 %v299, %v298
    %v302 = vunpack.c.l.b16 %v300
    %v303 = vunpack.c.h.b16 %v300
    %v304 = vpack.c.b16 %v302, %v302
    %v305 = vpack.c.b16 %v303, %v303
    %308 = vst [vmem:[#allocation8] sm:$0xf] %v304
    %309 = vst [vmem:[#allocation8 + $0x4] sm:$0xf] %v305
    // Predicated region
    $region34: #{tpu_custom_call.1} parent=1 // pred_check
      _
    $region35: #{tpu_custom_call.1} parent=1 // pred_check_branch
      %311 = sbr.rel (0) target = $region37
    $region36: #{tpu_custom_call.1} parent=1 // pred_region
      %s313 = ssub.s32 128, 128
      %314 = vsyncadd [#allocation4], %s313
      %s315 = sshll.u32 [#allocation8], 4
      %s316 = int_to_ptr.vmem [resolvable:$true] %s315
      %321 = dma.vmem_to_hbm [thread:$0]  %s316, 128, %s5, [#allocation4], 64, 64, 4
    $region37: #{tpu_custom_call.1} parent=1 // pred_fallthru
      _
    // Predicated region
    $region38: #{tpu_custom_call.1} parent=1 // pred_check
      _
    $region39: #{tpu_custom_call.1} parent=1 // pred_check_branch
      %323 = sbr.rel (0) target = $region41
    $region40: #{tpu_custom_call.1} parent=1 // pred_region
      %324 = dma.done [#allocation4], 128
    $region41: #{tpu_custom_call.1} parent=1 // pred_fallthru
      _
    %325 = vsyncpa [#allocation3], 1
    %326 = vsyncpa [#allocation6], 1
    %327 = vsyncpa [#allocation4], 1

</llo_original>
